<compile_context>
chip_gen: v6e
topology: v6e:2x2x1
jax: 0.10.0
libtpu: 0.0.40
codegen_flags: <defaults>
</compile_context>

<pallas_src>
import functools

import jax
import jax.numpy as jnp
from jax.experimental import pallas as pl
from jax.experimental.pallas import tpu as pltpu


# ---------------------------------------------------------------------------
# Kernel
# ---------------------------------------------------------------------------
def col_attn_kernel(x_ref, wq_ref, wk_ref, wv_ref, bq_ref, bk_ref, bv_ref,
                    gamma_ref, o_ref, *, approx_recip: bool):
    """One grid step processes TB column slices, each an (H, C) matrix.

    x_ref        : (TB, H, C)  input slices (caller dtype; f32 in the demo)
    wq/wk/wv_ref : (C, QK) / (C, QK) / (C, C) bf16 1x1-conv weights, transposed
    bq/bk/bv_ref : (1, QK) / (1, QK) / (1, C) f32 biases
    gamma_ref    : (1, 1) f32 scalar in SMEM
    o_ref        : (TB, H, C) output slices
    """
    tb, h, c = x_ref.shape
    qk = wq_ref.shape[1]

    x_f32 = x_ref[...].astype(jnp.float32)               # residual path, f32
    # Leading-dim merge (TB,H,C)->(TB*H,C) is free when H % 8 == 0; for other
    # H it is a correct (but slower) in-VMEM relayout.
    x2 = x_f32.reshape(tb * h, c).astype(jnp.bfloat16)   # bf16 MXU LHS

    # Three separate projections (avoids slicing a fused QKV output at
    # non-128-aligned lane offsets).  bf16 operands, f32 accumulation.
    q = (jnp.dot(x2, wq_ref[...], preferred_element_type=jnp.float32)
         + bq_ref[...]).reshape(tb, h, qk)
    k = (jnp.dot(x2, wk_ref[...], preferred_element_type=jnp.float32)
         + bk_ref[...]).reshape(tb, h, qk)
    v = (jnp.dot(x2, wv_ref[...], preferred_element_type=jnp.float32)
         + bv_ref[...]).reshape(tb, h, c)

    # col_attn = softmax(Q @ K^T, axis=-1) over key heights, batched over TB.
    s = jnp.einsum('bik,bjk->bij',
                   q.astype(jnp.bfloat16), k.astype(jnp.bfloat16),
                   preferred_element_type=jnp.float32)    # (TB, H, H) f32
    s = s - jnp.max(s, axis=-1, keepdims=True)
    p = jnp.exp(s)
    denom = jnp.sum(p, axis=-1, keepdims=True)
    if approx_recip:
        p = p * pl.reciprocal(denom, approx=True)         # EUP slot, inference
    else:
        p = p / denom                                     # exact, f32

    # out[i, c] = sum_j attn[i, j] * V[j, c]   (== torch.bmm(V, attn^T), transposed)
    out = jnp.einsum('bij,bjc->bic',
                     p.astype(jnp.bfloat16), v.astype(jnp.bfloat16),
                     preferred_element_type=jnp.float32)  # (TB, H, C) f32

    gamma = gamma_ref[0, 0]
    o_ref[...] = (gamma * out + x_f32).astype(o_ref.dtype)


# ---------------------------------------------------------------------------
# Tiling helpers (VMEM- and pipeline-aware tb selection)
# ---------------------------------------------------------------------------
def _round_up(v, m):
    return (v + m - 1) // m * m


def _pad2(rows, cols, itemsize):
    """Bytes of a 2-D slab after (8, 128) tile padding."""
    return _round_up(max(rows, 1), 8) * _round_up(max(cols, 1), 128) * itemsize


def _tile_footprint_bytes(tb, h, c, qk, in_itemsize):
    """Rough VMEM bytes for one grid step (lane/sublane padding included)."""
    x_io = tb * _pad2(h, c, in_itemsize)
    o_io = tb * _pad2(h, c, in_itemsize)
    qkv = tb * (2 * _pad2(h, qk, 4) + _pad2(h, c, 4))     # q, k, v (f32)
    probs = 2 * tb * _pad2(h, h, 4)                       # s and p (f32)
    acc = tb * _pad2(h, c, 4)                             # attn output (f32)
    xbf = tb * _pad2(h, c, 2)                             # bf16 copy of x
    w = (2 * _pad2(c, qk, 2) + _pad2(c, c, 2)
         + 2 * _pad2(1, qk, 4) + _pad2(1, c, 4))          # weights + biases
    total = 2 * (x_io + o_io) + qkv + probs + acc + xbf + 2 * w
    return int(total * 1.25)                              # compiler headroom


def _vmem_capacity_bytes():
    cap = 64 << 20                       # conservative fallback (v7x per-core)
    try:
        info = pltpu.get_tpu_info()
        cap = int(getattr(info, "vmem_capacity_bytes", cap))
    except Exception:
        pass
    return cap


def _pick_tb(n, h, c, qk, in_itemsize, vmem_budget, min_steps=8, max_tb=1024):
    """Largest divisor of n that fits the VMEM budget while keeping
    >= min_steps (and preferably an even number of) grid steps."""
    divisors = [d for d in range(1, min(n, max_tb) + 1) if n % d == 0]

    def fits(d):
        return _tile_footprint_bytes(d, h, c, qk, in_itemsize) <= vmem_budget

    tiers = [
        lambda d: fits(d) and (n // d) >= min_steps and (n // d) % 2 == 0,
        lambda d: fits(d) and (n // d) >= min_steps,
        lambda d: fits(d) and (n // d) >= 2,
        lambda d: fits(d),
        lambda d: True,
    ]
    for tier in tiers:
        cands = [d for d in divisors if tier(d)]
        if cands:
            return max(cands)
    return 1


# ---------------------------------------------------------------------------
# Wrappers
# ---------------------------------------------------------------------------
def col_attention_slices(x_slices, wq_t, bq, wk_t, bk, wv_t, bv, gamma, *,
                         tb=None, approx_recip=False):
    """Core entry point in the kernel-friendly layout.

    x_slices: (n, h, c) with n = b*w column slices; c sits on the lane axis.
    Weights are pre-transposed: wq_t (c, qk), wk_t (c, qk), wv_t (c, c).
    """
    n, h, c = x_slices.shape
    qk = wq_t.shape[1]
    itemsize = jnp.dtype(x_slices.dtype).itemsize

    vmem_cap = _vmem_capacity_bytes()
    budget = vmem_cap // 2               # ~32 MiB on v7x, ~64 MiB on v5e/v6e
    if tb is None:
        tb = _pick_tb(n, h, c, qk, itemsize, budget)
    assert n % tb == 0, f"tb={tb} must divide n={n}"
    n_blocks = n // tb

    footprint = _tile_footprint_bytes(tb, h, c, qk, itemsize)
    vmem_limit = int(min(max(vmem_cap - (4 << 20), 32 << 20),
                         max(32 << 20, 2 * footprint)))

    # bf16 weights (MXU operands); biases / gamma stay f32.
    wq_b = wq_t.astype(jnp.bfloat16)
    wk_b = wk_t.astype(jnp.bfloat16)
    wv_b = wv_t.astype(jnp.bfloat16)
    bq_f = bq.astype(jnp.float32)
    bk_f = bk.astype(jnp.float32)
    bv_f = bv.astype(jnp.float32)
    gamma_f = gamma.reshape(1, 1).astype(jnp.float32)

    kernel = functools.partial(col_attn_kernel, approx_recip=approx_recip)

    return pl.pallas_call(
        kernel,
        out_shape=jax.ShapeDtypeStruct((n, h, c), x_slices.dtype),
        grid=(n_blocks,),
        in_specs=[
            pl.BlockSpec((tb, h, c), lambda i: (i, 0, 0)),       # x slices
            pl.BlockSpec((c, qk), lambda i: (0, 0)),             # Wq^T
            pl.BlockSpec((c, qk), lambda i: (0, 0)),             # Wk^T
            pl.BlockSpec((c, c), lambda i: (0, 0)),              # Wv^T
            pl.BlockSpec((1, qk), lambda i: (0, 0)),             # bq
            pl.BlockSpec((1, qk), lambda i: (0, 0)),             # bk
            pl.BlockSpec((1, c), lambda i: (0, 0)),              # bv
            pl.BlockSpec(memory_space=pltpu.MemorySpace.SMEM),   # gamma scalar
        ],
        out_specs=pl.BlockSpec((tb, h, c), lambda i: (i, 0, 0)),
        compiler_params=pltpu.CompilerParams(
            dimension_semantics=("parallel",),
            vmem_limit_bytes=vmem_limit),
    )(x_slices, wq_b, wk_b, wv_b, bq_f, bk_f, bv_f, gamma_f)


def col_attention(x, wq_t, bq, wk_t, bk, wv_t, bv, gamma, *, tb=None,
                  approx_recip=False):
    """NCHW adapter matching the PyTorch module: x is (b, c, h, w).

    The two layout permutes below are ordinary XLA transposes (one HBM pass
    each); in a real model keep the surrounding ops in the (b*w, h, c) slice
    layout and call col_attention_slices directly to avoid them.
    """
    b, c, h, w = x.shape
    x_r = jnp.transpose(x, (0, 3, 2, 1)).reshape(b * w, h, c)
    out = col_attention_slices(x_r, wq_t, bq, wk_t, bk, wv_t, bv, gamma,
                               tb=tb, approx_recip=approx_recip)
    return out.reshape(b, w, h, c).transpose(0, 3, 2, 1)


# ---------------------------------------------------------------------------
# Pure-JAX reference (mirrors the PyTorch forward, all f32)
# ---------------------------------------------------------------------------
def ref_col_attention(x, wq_t, bq, wk_t, bk, wv_t, bv, gamma):
    b, c, h, w = x.shape
    xr = jnp.transpose(x, (0, 3, 2, 1)).reshape(b * w, h, c)
    q = xr @ wq_t + bq
    k = xr @ wk_t + bk
    v = xr @ wv_t + bv
    attn = jax.nn.softmax(q @ jnp.swapaxes(k, 1, 2), axis=-1)
    out = attn @ v
    out = gamma[0, 0] * out + xr
    return out.reshape(b, w, h, c).transpose(0, 3, 2, 1)


if __name__ == "__main__":
    # Small shapes consistent with the module: NCHW input, q_k_dim < in_dim.
    b, c, h, w = 2, 4, 16, 16
    qk = 8

    key = jax.random.PRNGKey(0)
    kx, kq, kk, kv, kbq, kbk, kbv = jax.random.split(key, 7)

    x = jax.random.normal(kx, (b, c, h, w), dtype=jnp.float32)

    # Conv2d(in_dim, q_k_dim, 1) weight is (out, in, 1, 1); stored transposed (in, out).
    wq_t = jax.random.normal(kq, (c, qk), dtype=jnp.float32) * 0.1
    wk_t = jax.random.normal(kk, (c, qk), dtype=jnp.float32) * 0.1
    wv_t = jax.random.normal(kv, (c, c), dtype=jnp.float32) * 0.1
    bq = jax.random.normal(kbq, (1, qk), dtype=jnp.float32) * 0.1
    bk = jax.random.normal(kbk, (1, qk), dtype=jnp.float32) * 0.1
    bv = jax.random.normal(kbv, (1, c), dtype=jnp.float32) * 0.1
    # nn.Parameter(torch.zeros(1)) in the module; nonzero here so the attention
    # path actually contributes in this synthetic test.
    gamma = jnp.full((1, 1), 0.5, dtype=jnp.float32)

    out = col_attention(x, wq_t, bq, wk_t, bk, wv_t, bv, gamma)
    out = jax.block_until_ready(out)

    ref = ref_col_attention(x, wq_t, bq, wk_t, bk, wv_t, bv, gamma)
    assert out.shape == (b, c, h, w)
    # Tolerance accounts for bf16 MXU operands (accumulation and softmax are f32).
    err = float(jnp.max(jnp.abs(out - ref)))
    assert err < 2e-2, f"mismatch vs pure-JAX reference: {err}"

    print("KERNEL_OK")
</pallas_src>

<mosaic_0001>
module attributes {stable_mosaic.version = 11 : i64} {
  func.func @col_attn_kernel(%arg0: i32, %arg1: memref<4x16x4xf32, #tpu.memory_space<vmem>>, %arg2: memref<4x8xbf16, #tpu.memory_space<vmem>>, %arg3: memref<4x8xbf16, #tpu.memory_space<vmem>>, %arg4: memref<4x4xbf16, #tpu.memory_space<vmem>>, %arg5: memref<1x8xf32, #tpu.memory_space<vmem>>, %arg6: memref<1x8xf32, #tpu.memory_space<vmem>>, %arg7: memref<1x4xf32, #tpu.memory_space<vmem>>, %arg8: memref<1x1xf32, #tpu.memory_space<smem>>, %arg9: memref<4x16x4xf32, #tpu.memory_space<vmem>>) attributes {dimension_semantics = [#tpu.dimension_semantics<parallel>], iteration_bounds = array<i64: 8>, scalar_prefetch = 0 : i64, scratch_operands = 0 : i64, tpu.core_type = #tpu.core_type<tc>, window_params = [{transform_indices = @transform_0, window_bounds = array<i64: 4, 16, 4>}, {pipeline_mode = #tpu.pipeline_mode<synchronous>, transform_indices = @transform_1, window_bounds = array<i64: 4, 8>}, {pipeline_mode = #tpu.pipeline_mode<synchronous>, transform_indices = @transform_2, window_bounds = array<i64: 4, 8>}, {pipeline_mode = #tpu.pipeline_mode<synchronous>, transform_indices = @transform_3, window_bounds = array<i64: 4, 4>}, {pipeline_mode = #tpu.pipeline_mode<synchronous>, transform_indices = @transform_4, window_bounds = array<i64: 1, 8>}, {pipeline_mode = #tpu.pipeline_mode<synchronous>, transform_indices = @transform_5, window_bounds = array<i64: 1, 8>}, {pipeline_mode = #tpu.pipeline_mode<synchronous>, transform_indices = @transform_6, window_bounds = array<i64: 1, 4>}, {transform_indices = @transform_7, window_bounds = array<i64: 1, 1>}, {transform_indices = @transform_8, window_bounds = array<i64: 4, 16, 4>}]} {
    %c0 = arith.constant 0 : index
    %c0_0 = arith.constant 0 : index
    %c0_1 = arith.constant 0 : index
    %0 = vector.load %arg1[%c0, %c0_0, %c0_1] : memref<4x16x4xf32, #tpu.memory_space<vmem>>, vector<4x16x4xf32>
    %1 = vector.shape_cast %0 : vector<4x16x4xf32> to vector<64x4xf32>
    %2 = arith.truncf %1 : vector<64x4xf32> to vector<64x4xbf16>
    %c0_2 = arith.constant 0 : index
    %c0_3 = arith.constant 0 : index
    %3 = vector.load %arg2[%c0_2, %c0_3] : memref<4x8xbf16, #tpu.memory_space<vmem>>, vector<4x8xbf16>
    %cst = arith.constant dense<0.000000e+00> : vector<64x8xf32>
    %4 = tpu.matmul %2, %3, %cst {dimension_numbers = #tpu.dot_dimension_numbers<[1], [0], [0], [1], [0, 0, 1, 1], [], []>} : vector<64x4xbf16>, vector<4x8xbf16>, vector<64x8xf32> -> vector<64x8xf32>
    %c0_4 = arith.constant 0 : index
    %c0_5 = arith.constant 0 : index
    %5 = vector.load %arg5[%c0_4, %c0_5] : memref<1x8xf32, #tpu.memory_space<vmem>>, vector<1x8xf32>
    %6 = vector.broadcast %5 : vector<1x8xf32> to vector<64x8xf32>
    %7 = arith.addf %4, %6 : vector<64x8xf32>
    %8 = vector.shape_cast %7 : vector<64x8xf32> to vector<4x16x8xf32>
    %c0_6 = arith.constant 0 : index
    %c0_7 = arith.constant 0 : index
    %9 = vector.load %arg3[%c0_6, %c0_7] : memref<4x8xbf16, #tpu.memory_space<vmem>>, vector<4x8xbf16>
    %cst_8 = arith.constant dense<0.000000e+00> : vector<64x8xf32>
    %10 = tpu.matmul %2, %9, %cst_8 {dimension_numbers = #tpu.dot_dimension_numbers<[1], [0], [0], [1], [0, 0, 1, 1], [], []>} : vector<64x4xbf16>, vector<4x8xbf16>, vector<64x8xf32> -> vector<64x8xf32>
    %c0_9 = arith.constant 0 : index
    %c0_10 = arith.constant 0 : index
    %11 = vector.load %arg6[%c0_9, %c0_10] : memref<1x8xf32, #tpu.memory_space<vmem>>, vector<1x8xf32>
    %12 = vector.broadcast %11 : vector<1x8xf32> to vector<64x8xf32>
    %13 = arith.addf %10, %12 : vector<64x8xf32>
    %14 = vector.shape_cast %13 : vector<64x8xf32> to vector<4x16x8xf32>
    %c0_11 = arith.constant 0 : index
    %c0_12 = arith.constant 0 : index
    %15 = vector.load %arg4[%c0_11, %c0_12] : memref<4x4xbf16, #tpu.memory_space<vmem>>, vector<4x4xbf16>
    %cst_13 = arith.constant dense<0.000000e+00> : vector<64x4xf32>
    %16 = tpu.matmul %2, %15, %cst_13 {dimension_numbers = #tpu.dot_dimension_numbers<[1], [0], [0], [1], [0, 0, 1, 1], [], []>} : vector<64x4xbf16>, vector<4x4xbf16>, vector<64x4xf32> -> vector<64x4xf32>
    %c0_14 = arith.constant 0 : index
    %c0_15 = arith.constant 0 : index
    %17 = vector.load %arg7[%c0_14, %c0_15] : memref<1x4xf32, #tpu.memory_space<vmem>>, vector<1x4xf32>
    %18 = vector.broadcast %17 : vector<1x4xf32> to vector<64x4xf32>
    %19 = arith.addf %16, %18 : vector<64x4xf32>
    %20 = vector.shape_cast %19 : vector<64x4xf32> to vector<4x16x4xf32>
    %21 = arith.truncf %8 : vector<4x16x8xf32> to vector<4x16x8xbf16>
    %22 = arith.truncf %14 : vector<4x16x8xf32> to vector<4x16x8xbf16>
    "tpu.trace_start"() <{level = 10 : i32, message = "bik,bjk->bij"}> : () -> ()
    %cst_16 = arith.constant dense<0.000000e+00> : vector<4x16x16xf32>
    %23 = tpu.matmul %21, %22, %cst_16 {dimension_numbers = #tpu.dot_dimension_numbers<[2], [2], [1], [1], [0, 0, 0, 1, 1, 1], [0], [0]>} : vector<4x16x8xbf16>, vector<4x16x8xbf16>, vector<4x16x16xf32> -> vector<4x16x16xf32>
    "tpu.trace_stop"() : () -> ()
    %cst_17 = arith.constant dense<0xFF800000> : vector<4x16xf32>
    %24 = vector.multi_reduction <maximumf>, %23, %cst_17 [2] : vector<4x16x16xf32> to vector<4x16xf32>
    %25 = vector.shape_cast %24 : vector<4x16xf32> to vector<4x16x1xf32>
    %26 = vector.broadcast %25 : vector<4x16x1xf32> to vector<4x16x16xf32>
    %27 = arith.subf %23, %26 : vector<4x16x16xf32>
    %28 = math.exp %27 : vector<4x16x16xf32>
    %cst_18 = arith.constant dense<0.000000e+00> : vector<4x16xf32>
    %29 = vector.multi_reduction <add>, %28, %cst_18 [2] : vector<4x16x16xf32> to vector<4x16xf32>
    %30 = vector.shape_cast %29 : vector<4x16xf32> to vector<4x16x1xf32>
    %31 = vector.broadcast %30 : vector<4x16x1xf32> to vector<4x16x16xf32>
    %32 = arith.divf %28, %31 : vector<4x16x16xf32>
    %33 = arith.truncf %32 : vector<4x16x16xf32> to vector<4x16x16xbf16>
    %34 = arith.truncf %20 : vector<4x16x4xf32> to vector<4x16x4xbf16>
    "tpu.trace_start"() <{level = 10 : i32, message = "bij,bjc->bic"}> : () -> ()
    %cst_19 = arith.constant dense<0.000000e+00> : vector<4x16x4xf32>
    %35 = tpu.matmul %33, %34, %cst_19 {dimension_numbers = #tpu.dot_dimension_numbers<[2], [1], [1], [2], [0, 0, 0, 1, 1, 2], [0], [0]>} : vector<4x16x16xbf16>, vector<4x16x4xbf16>, vector<4x16x4xf32> -> vector<4x16x4xf32>
    "tpu.trace_stop"() : () -> ()
    %c0_20 = arith.constant 0 : index
    %c0_21 = arith.constant 0 : index
    %36 = memref.load %arg8[%c0_20, %c0_21] : memref<1x1xf32, #tpu.memory_space<smem>>
    %37 = vector.broadcast %36 : f32 to vector<4x16x4xf32>
    %38 = arith.mulf %37, %35 : vector<4x16x4xf32>
    %39 = arith.addf %38, %0 : vector<4x16x4xf32>
    %c0_22 = arith.constant 0 : index
    %c0_23 = arith.constant 0 : index
    %c0_24 = arith.constant 0 : index
    %40 = vector.load %arg9[%c0_22, %c0_23, %c0_24] : memref<4x16x4xf32, #tpu.memory_space<vmem>>, vector<4x16x4xf32>
    tpu.vector_store %arg9[%c0_22, %c0_23, %c0_24], %39 {strides = array<i32>} : memref<4x16x4xf32, #tpu.memory_space<vmem>>, vector<4x16x4xf32>,
    return
  }
  func.func @transform_0(%arg0: i32) -> (i32, i32, i32) {
    %c0_i32 = arith.constant 0 : i32
    %c0_i32_0 = arith.constant 0 : i32
    %c0_i32_1 = arith.constant 0 : i32
    return %arg0, %c0_i32, %c0_i32_0 : i32, i32, i32
  }
  func.func @transform_1(%arg0: i32) -> (i32, i32) {
    %c0_i32 = arith.constant 0 : i32
    %c0_i32_0 = arith.constant 0 : i32
    %c0_i32_1 = arith.constant 0 : i32
    return %c0_i32, %c0_i32_0 : i32, i32
  }
  func.func @transform_2(%arg0: i32) -> (i32, i32) {
    %c0_i32 = arith.constant 0 : i32
    %c0_i32_0 = arith.constant 0 : i32
    %c0_i32_1 = arith.constant 0 : i32
    return %c0_i32, %c0_i32_0 : i32, i32
  }
  func.func @transform_3(%arg0: i32) -> (i32, i32) {
    %c0_i32 = arith.constant 0 : i32
    %c0_i32_0 = arith.constant 0 : i32
    %c0_i32_1 = arith.constant 0 : i32
    return %c0_i32, %c0_i32_0 : i32, i32
  }
  func.func @transform_4(%arg0: i32) -> (i32, i32) {
    %c0_i32 = arith.constant 0 : i32
    %c0_i32_0 = arith.constant 0 : i32
    %c0_i32_1 = arith.constant 0 : i32
    return %c0_i32, %c0_i32_0 : i32, i32
  }
  func.func @transform_5(%arg0: i32) -> (i32, i32) {
    %c0_i32 = arith.constant 0 : i32
    %c0_i32_0 = arith.constant 0 : i32
    %c0_i32_1 = arith.constant 0 : i32
    return %c0_i32, %c0_i32_0 : i32, i32
  }
  func.func @transform_6(%arg0: i32) -> (i32, i32) {
    %c0_i32 = arith.constant 0 : i32
    %c0_i32_0 = arith.constant 0 : i32
    %c0_i32_1 = arith.constant 0 : i32
    return %c0_i32, %c0_i32_0 : i32, i32
  }
  func.func @transform_7(%arg0: i32) -> (i32, i32) {
    %c0_i32 = arith.constant 0 : i32
    %c0_i32_0 = arith.constant 0 : i32
    %c0_i32_1 = arith.constant 0 : i32
    return %c0_i32, %c0_i32_0 : i32, i32
  }
  func.func @transform_8(%arg0: i32) -> (i32, i32, i32) {
    %c0_i32 = arith.constant 0 : i32
    %c0_i32_0 = arith.constant 0 : i32
    %c0_i32_1 = arith.constant 0 : i32
    return %arg0, %c0_i32, %c0_i32_0 : i32, i32, i32
  }
}

</mosaic_0001>

<llo_original>
// kernel: tpu_custom_call.1
$region0: #{tpu_custom_call.1}
  #allocation0 [shape = 'u32[]', space=smem, size = 0x4, offset = 0x4, fixed_abs, tag = 'smem constant byte address 0x4 - core index']
  #allocation1 [shape = 'u32[144,128]{1,0:T(1,128)}', space=vmem, size = 0x12000, scoped, tag = 'internal scratch']
  #allocation2 [shape = 'f32[1,1]{1,0:T(1,128)S(6)}', space=smem, size = 0x200, scoped, tag = 'scoped memory for tpu_custom_call.1']
  %s0 = inlined_call_operand.vmem [shape: f32[32,16,4], index: 0, kind: input, shape index: {}]
  %s1 = inlined_call_operand.vmem [shape: bf16[4,8], index: 1, kind: input, shape index: {}]
  %s2 = inlined_call_operand.vmem [shape: bf16[4,8], index: 2, kind: input, shape index: {}]
  %s3 = inlined_call_operand.vmem [shape: bf16[4,4], index: 3, kind: input, shape index: {}]
  %s4 = inlined_call_operand.vmem [shape: f32[1,8], index: 4, kind: input, shape index: {}]
  %s5 = inlined_call_operand.vmem [shape: f32[1,8], index: 5, kind: input, shape index: {}]
  %s6 = inlined_call_operand.vmem [shape: f32[1,4], index: 6, kind: input, shape index: {}]
  %s7 = inlined_call_operand.<no memory space> [shape: f32[1,1], index: 7, kind: input, shape index: {}]
  %s8 = inlined_call_operand.vmem [shape: f32[32,16,4], index: 8, kind: output, shape index: {}]
  %s9 = sld [smem:[#allocation0]]
  $region65: #{tpu_custom_call.1} parent=0
    _
  %s11 = ssub.s32 1, %s9
  %s12 = scalar_select 0, %s11, %s9
  %13 = sst [smem:[#allocation2]] %s7
  loop: start=0, step=1, limit=10
  $region2: #{tpu_custom_call.1} parent=0 // loop_pre_header
    _
  $region3: #{tpu_custom_call.1} parent=0 // loop_header
    %s15 = sphi 0, %s19
    %p16 = scmp.ge.s32.totalorder %s15, 10
    %s25 = sphi 0, %s27
    %s28 = sphi 0, %s25
    %s29 = sphi 0, %s28
    %s45 = sphi 0, %s29
    %s49 = sphi 0, %s49
    %s51 = sphi 0, %s49
    %s52 = sphi 0, %s51
    %s66 = sphi 0, %s52
    %s70 = sphi 0, %s70
    %s72 = sphi 0, %s70
    %s73 = sphi 0, %s72
    %s87 = sphi 0, %s73
    %s91 = sphi 0, %s91
    %s93 = sphi 0, %s91
    %s94 = sphi 0, %s93
    %s108 = sphi 0, %s94
    %s112 = sphi 0, %s112
    %s114 = sphi 0, %s112
    %s115 = sphi 0, %s114
    %s129 = sphi 0, %s115
    %s133 = sphi 0, %s133
    %s135 = sphi 0, %s133
    %s136 = sphi 0, %s135
    %s150 = sphi 0, %s136
    %s154 = sphi 0, %s154
    %s156 = sphi 0, %s154
    %s157 = sphi 0, %s156
    %s171 = sphi 0, %s157
    %s175 = sphi 0, %s175
    %s177 = sphi 0, %s175
    %s178 = sphi 0, %s177
    %s192 = sphi 0, %s178
    %s198 = sphi 0, %s200
    %s201 = sphi 0, %s198
    %s202 = sphi 0, %s201
    %s218 = sphi 0, %s202
  $region4: #{tpu_custom_call.1} parent=0 // loop_header_branch
    %18 = sbr.rel (%p16) target = $region8
  $region5: #{tpu_custom_call.1} parent=0 // loop_body
    %s20 = ssub.s32 %s15, 1
    %s21 = ssub.s32 %s15, 2
    %s22 = sadd.s32 %s15, 1
    %s23 = ssub.s32 %s15, %s22
    %p24 = scmp.eq.s32.totalorder %s23, 0
    %s26 = sadd.s32 %s25, 1
    %s27 = scalar_select %p24, %s25, %s26
    %p30 = pneg %p24
    %p31 = scmp.eq.s32.totalorder %s15, 7
    %p32 = por %p30, %p31
    %p33 = scmp.ne.s32.totalorder %s25, %s28
    %p34 = scmp.eq.s32.totalorder %s15, 0
    %p35 = por %p33, %p34
    %p36 = scmp.ne.s32.totalorder %s25, %s28
    %p37 = scmp.eq.s32.totalorder %s20, 7
    %p38 = por %p36, %p37
    %p39 = scmp.ne.s32.totalorder %s28, %s29
    %p40 = scmp.eq.s32.totalorder %s20, 0
    %p41 = por %p39, %p40
    %p42 = scmp.ne.s32.totalorder %s28, %s29
    %p43 = scmp.eq.s32.totalorder %s21, 7
    %p44 = por %p42, %p43
    %p46 = scmp.ne.s32.totalorder %s29, %s45
    %p47 = scmp.eq.s32.totalorder %s21, 0
    %p48 = por %p46, %p47
    %s50 = sadd.s32 %s49, 1
    %p53 = scmp.eq.s32.totalorder %s15, 7
    %p54 = scmp.ne.s32.totalorder %s49, %s51
    %p55 = scmp.eq.s32.totalorder %s15, 0
    %p56 = por %p54, %p55
    %p57 = scmp.ne.s32.totalorder %s49, %s51
    %p58 = scmp.eq.s32.totalorder %s20, 7
    %p59 = por %p57, %p58
    %p60 = scmp.ne.s32.totalorder %s51, %s52
    %p61 = scmp.eq.s32.totalorder %s20, 0
    %p62 = por %p60, %p61
    %p63 = scmp.ne.s32.totalorder %s51, %s52
    %p64 = scmp.eq.s32.totalorder %s21, 7
    %p65 = por %p63, %p64
    %p67 = scmp.ne.s32.totalorder %s52, %s66
    %p68 = scmp.eq.s32.totalorder %s21, 0
    %p69 = por %p67, %p68
    %s71 = sadd.s32 %s70, 1
    %p74 = scmp.eq.s32.totalorder %s15, 7
    %p75 = scmp.ne.s32.totalorder %s70, %s72
    %p76 = scmp.eq.s32.totalorder %s15, 0
    %p77 = por %p75, %p76
    %p78 = scmp.ne.s32.totalorder %s70, %s72
    %p79 = scmp.eq.s32.totalorder %s20, 7
    %p80 = por %p78, %p79
    %p81 = scmp.ne.s32.totalorder %s72, %s73
    %p82 = scmp.eq.s32.totalorder %s20, 0
    %p83 = por %p81, %p82
    %p84 = scmp.ne.s32.totalorder %s72, %s73
    %p85 = scmp.eq.s32.totalorder %s21, 7
    %p86 = por %p84, %p85
    %p88 = scmp.ne.s32.totalorder %s73, %s87
    %p89 = scmp.eq.s32.totalorder %s21, 0
    %p90 = por %p88, %p89
    %s92 = sadd.s32 %s91, 1
    %p95 = scmp.eq.s32.totalorder %s15, 7
    %p96 = scmp.ne.s32.totalorder %s91, %s93
    %p97 = scmp.eq.s32.totalorder %s15, 0
    %p98 = por %p96, %p97
    %p99 = scmp.ne.s32.totalorder %s91, %s93
    %p100 = scmp.eq.s32.totalorder %s20, 7
    %p101 = por %p99, %p100
    %p102 = scmp.ne.s32.totalorder %s93, %s94
    %p103 = scmp.eq.s32.totalorder %s20, 0
    %p104 = por %p102, %p103
    %p105 = scmp.ne.s32.totalorder %s93, %s94
    %p106 = scmp.eq.s32.totalorder %s21, 7
    %p107 = por %p105, %p106
    %p109 = scmp.ne.s32.totalorder %s94, %s108
    %p110 = scmp.eq.s32.totalorder %s21, 0
    %p111 = por %p109, %p110
    %s113 = sadd.s32 %s112, 1
    %p116 = scmp.eq.s32.totalorder %s15, 7
    %p117 = scmp.ne.s32.totalorder %s112, %s114
    %p118 = scmp.eq.s32.totalorder %s15, 0
    %p119 = por %p117, %p118
    %p120 = scmp.ne.s32.totalorder %s112, %s114
    %p121 = scmp.eq.s32.totalorder %s20, 7
    %p122 = por %p120, %p121
    %p123 = scmp.ne.s32.totalorder %s114, %s115
    %p124 = scmp.eq.s32.totalorder %s20, 0
    %p125 = por %p123, %p124
    %p126 = scmp.ne.s32.totalorder %s114, %s115
    %p127 = scmp.eq.s32.totalorder %s21, 7
    %p128 = por %p126, %p127
    %p130 = scmp.ne.s32.totalorder %s115, %s129
    %p131 = scmp.eq.s32.totalorder %s21, 0
    %p132 = por %p130, %p131
    %s134 = sadd.s32 %s133, 1
    %p137 = scmp.eq.s32.totalorder %s15, 7
    %p138 = scmp.ne.s32.totalorder %s133, %s135
    %p139 = scmp.eq.s32.totalorder %s15, 0
    %p140 = por %p138, %p139
    %p141 = scmp.ne.s32.totalorder %s133, %s135
    %p142 = scmp.eq.s32.totalorder %s20, 7
    %p143 = por %p141, %p142
    %p144 = scmp.ne.s32.totalorder %s135, %s136
    %p145 = scmp.eq.s32.totalorder %s20, 0
    %p146 = por %p144, %p145
    %p147 = scmp.ne.s32.totalorder %s135, %s136
    %p148 = scmp.eq.s32.totalorder %s21, 7
    %p149 = por %p147, %p148
    %p151 = scmp.ne.s32.totalorder %s136, %s150
    %p152 = scmp.eq.s32.totalorder %s21, 0
    %p153 = por %p151, %p152
    %s155 = sadd.s32 %s154, 1
    %p158 = scmp.eq.s32.totalorder %s15, 7
    %p159 = scmp.ne.s32.totalorder %s154, %s156
    %p160 = scmp.eq.s32.totalorder %s15, 0
    %p161 = por %p159, %p160
    %p162 = scmp.ne.s32.totalorder %s154, %s156
    %p163 = scmp.eq.s32.totalorder %s20, 7
    %p164 = por %p162, %p163
    %p165 = scmp.ne.s32.totalorder %s156, %s157
    %p166 = scmp.eq.s32.totalorder %s20, 0
    %p167 = por %p165, %p166
    %p168 = scmp.ne.s32.totalorder %s156, %s157
    %p169 = scmp.eq.s32.totalorder %s21, 7
    %p170 = por %p168, %p169
    %p172 = scmp.ne.s32.totalorder %s157, %s171
    %p173 = scmp.eq.s32.totalorder %s21, 0
    %p174 = por %p172, %p173
    %s176 = sadd.s32 %s175, 1
    %p179 = scmp.eq.s32.totalorder %s15, 7
    %p180 = scmp.ne.s32.totalorder %s175, %s177
    %p181 = scmp.eq.s32.totalorder %s15, 0
    %p182 = por %p180, %p181
    %p183 = scmp.ne.s32.totalorder %s175, %s177
    %p184 = scmp.eq.s32.totalorder %s20, 7
    %p185 = por %p183, %p184
    %p186 = scmp.ne.s32.totalorder %s177, %s178
    %p187 = scmp.eq.s32.totalorder %s20, 0
    %p188 = por %p186, %p187
    %p189 = scmp.ne.s32.totalorder %s177, %s178
    %p190 = scmp.eq.s32.totalorder %s21, 7
    %p191 = por %p189, %p190
    %p193 = scmp.ne.s32.totalorder %s178, %s192
    %p194 = scmp.eq.s32.totalorder %s21, 0
    %p195 = por %p193, %p194
    %s196 = ssub.s32 %s15, %s22
    %p197 = scmp.eq.s32.totalorder %s196, 0
    %s199 = sadd.s32 %s198, 1
    %s200 = scalar_select %p197, %s198, %s199
    %p203 = pneg %p197
    %p204 = scmp.eq.s32.totalorder %s15, 7
    %p205 = por %p203, %p204
    %p206 = scmp.ne.s32.totalorder %s198, %s201
    %p207 = scmp.eq.s32.totalorder %s15, 0
    %p208 = por %p206, %p207
    %p209 = scmp.ne.s32.totalorder %s198, %s201
    %p210 = scmp.eq.s32.totalorder %s20, 7
    %p211 = por %p209, %p210
    %p212 = scmp.ne.s32.totalorder %s201, %s202
    %p213 = scmp.eq.s32.totalorder %s20, 0
    %p214 = por %p212, %p213
    %p215 = scmp.ne.s32.totalorder %s201, %s202
    %p216 = scmp.eq.s32.totalorder %s21, 7
    %p217 = por %p215, %p216
    %p219 = scmp.ne.s32.totalorder %s202, %s218
    %p220 = scmp.eq.s32.totalorder %s21, 0
    %p221 = por %p219, %p220
    %p222 = scmp.le.s32.totalorder 1, %s15
    %p223 = scmp.lt.s32.totalorder %s15, 9
    %p224 = pnand %p222, %p223
    %p225 = pneg %p224
    // Predicated region
    $region9: #{tpu_custom_call.1} parent=5 // pred_check
      _
    $region10: #{tpu_custom_call.1} parent=5 // pred_check_branch
      %227 = sbr.rel (%p224) target = $region12
    $region11: #{tpu_custom_call.1} parent=5 // pred_region
      %s228 = ssub.s32 %s15, 1
      // Predicated region
      $region13: #{tpu_custom_call.1} parent=11 // pred_check
        %p229 = pneg %p62
      $region14: #{tpu_custom_call.1} parent=11 // pred_check_branch
        %231 = sbr.rel (%p229) target = $region16
      $region15: #{tpu_custom_call.1} parent=11 // pred_region
        _
      $region16: #{tpu_custom_call.1} parent=11 // pred_fallthru
        _
      // Predicated region
      $region17: #{tpu_custom_call.1} parent=11 // pred_check
        %p232 = pneg %p83
      $region18: #{tpu_custom_call.1} parent=11 // pred_check_branch
        %234 = sbr.rel (%p232) target = $region20
      $region19: #{tpu_custom_call.1} parent=11 // pred_region
        _
      $region20: #{tpu_custom_call.1} parent=11 // pred_fallthru
        _
      // Predicated region
      $region21: #{tpu_custom_call.1} parent=11 // pred_check
        %p235 = pneg %p104
      $region22: #{tpu_custom_call.1} parent=11 // pred_check_branch
        %237 = sbr.rel (%p235) target = $region24
      $region23: #{tpu_custom_call.1} parent=11 // pred_region
        _
      $region24: #{tpu_custom_call.1} parent=11 // pred_fallthru
        _
      // Predicated region
      $region25: #{tpu_custom_call.1} parent=11 // pred_check
        %p238 = pneg %p125
      $region26: #{tpu_custom_call.1} parent=11 // pred_check_branch
        %240 = sbr.rel (%p238) target = $region28
      $region27: #{tpu_custom_call.1} parent=11 // pred_region
        _
      $region28: #{tpu_custom_call.1} parent=11 // pred_fallthru
        _
      // Predicated region
      $region29: #{tpu_custom_call.1} parent=11 // pred_check
        %p241 = pneg %p146
      $region30: #{tpu_custom_call.1} parent=11 // pred_check_branch
        %243 = sbr.rel (%p241) target = $region32
      $region31: #{tpu_custom_call.1} parent=11 // pred_region
        _
      $region32: #{tpu_custom_call.1} parent=11 // pred_fallthru
        _
      // Predicated region
      $region33: #{tpu_custom_call.1} parent=11 // pred_check
        %p244 = pneg %p167
      $region34: #{tpu_custom_call.1} parent=11 // pred_check_branch
        %246 = sbr.rel (%p244) target = $region36
      $region35: #{tpu_custom_call.1} parent=11 // pred_region
        _
      $region36: #{tpu_custom_call.1} parent=11 // pred_fallthru
        _
      // Predicated region
      $region37: #{tpu_custom_call.1} parent=11 // pred_check
        %p247 = pneg %p188
      $region38: #{tpu_custom_call.1} parent=11 // pred_check_branch
        %249 = sbr.rel (%p247) target = $region40
      $region39: #{tpu_custom_call.1} parent=11 // pred_region
        _
      $region40: #{tpu_custom_call.1} parent=11 // pred_fallthru
        _
    $region12: #{tpu_custom_call.1} parent=5 // pred_fallthru
      _
    %p250 = scmp.lt.s32.totalorder %s15, 8
    // Predicated region
    $region41: #{tpu_custom_call.1} parent=5 // pred_check
      %p251 = pneg %p250
    $region42: #{tpu_custom_call.1} parent=5 // pred_check_branch
      %253 = sbr.rel (%p251) target = $region44
    $region43: #{tpu_custom_call.1} parent=5 // pred_region
      // Predicated region
      $region45: #{tpu_custom_call.1} parent=43 // pred_check
        %p254 = pneg %p35
      $region46: #{tpu_custom_call.1} parent=43 // pred_check_branch
        %256 = sbr.rel (%p254) target = $region48
      $region47: #{tpu_custom_call.1} parent=43 // pred_region
        %s257 = smul.u32 4, %s15
        %p258 = scmp.lt.s32.totalorder %s257, 31
        %s259 = scalar_select %p258, %s257, 31
        %s260 = smul.addr %s259, 2
        %s261 = smul.addr %s260, 8
        %s262 = scalar_lea.vmem %s0, %s261
        %s263 = smul.u32 4, %s15
      $region48: #{tpu_custom_call.1} parent=43 // pred_fallthru
        _
    $region44: #{tpu_custom_call.1} parent=5 // pred_fallthru
      _
    %p264 = scmp.le.s32.totalorder 1, %s15
    %p265 = scmp.lt.s32.totalorder %s15, 9
    %p266 = pnand %p264, %p265
    %p267 = pneg %p266
    // Predicated region
    $region49: #{tpu_custom_call.1} parent=5 // pred_check
      _
    $region50: #{tpu_custom_call.1} parent=5 // pred_check_branch
      %269 = sbr.rel (%p266) target = $region52
    $region51: #{tpu_custom_call.1} parent=5 // pred_region
      %s270 = ssub.s32 %s15, 1
      %s271 = smul.u32 4, %s20
      %p272 = scmp.lt.s32.totalorder %s271, 31
      %s273 = scalar_select %p272, %s271, 31
      %s274 = smul.addr %s273, 2
      %s275 = smul.addr %s274, 8
      %s276 = scalar_lea.vmem %s0, %s275
      %p277 = pneg %p41
      %p278 = pneg %p38
      %p279 = pneg %p62
      %p280 = pneg %p59
      %p281 = pneg %p83
      %p282 = pneg %p80
      %p283 = pneg %p104
      %p284 = pneg %p101
      %p285 = pneg %p125
      %p286 = pneg %p122
      %p287 = pneg %p146
      %p288 = pneg %p143
      %p289 = pneg %p167
      %p290 = pneg %p164
      %p291 = pneg %p188
      %p292 = pneg %p185
      %p293 = pneg %p214
      %p294 = pneg %p211
      %s295 = smul.u32 4, %s20
      %p296 = scmp.lt.s32.totalorder %s295, 31
      %s297 = scalar_select %p296, %s295, 31
      %s298 = smul.addr %s297, 2
      %s299 = smul.addr %s298, 8
      %s300 = scalar_lea.vmem %s8, %s299
      %s301 = smul.u32 4, %s20
      %p302 = scmp.lt.s32.totalorder %s301, 31
      %s303 = scalar_select %p302, %s301, 31
      %s304 = smul.addr %s303, 2
      %s305 = smul.addr %s304, 8
      %s306 = scalar_lea.vmem %s0, %s305
      %s307 = smul.u32 4, %s20
      %s308 = smul.u32 4, %s20
      %p309 = scmp.lt.s32.totalorder %s308, 31
      %s310 = scalar_select %p309, %s308, 31
      %s311 = smul.addr %s310, 2
      %s312 = smul.addr %s311, 8
      %s313 = scalar_lea.vmem %s8, %s312
      %s314 = smul.u32 4, %s20
      %v316 = vld [vmem:[%s306] sm:$0xff]
      %v317 = vld [vmem:[%s306 + $0x8] sm:$0xff]
      %v318 = vld [vmem:[%s306 + $0x10] sm:$0xff]
      %v319 = vld [vmem:[%s306 + $0x18] sm:$0xff]
      %v320 = vld [vmem:[%s306 + $0x20] sm:$0xff]
      %v321 = vld [vmem:[%s306 + $0x28] sm:$0xff]
      %v322 = vld [vmem:[%s306 + $0x30] sm:$0xff]
      %v323 = vld [vmem:[%s306 + $0x38] sm:$0xff]
      %v324 = vpack.c.bf16 %v317, %v316
      %v325 = vpack.c.bf16 %v319, %v318
      %v326 = vpack.c.bf16 %v321, %v320
      %v327 = vpack.c.bf16 %v323, %v322
      %v328 = vld [vmem:[%s1] sm:$0x3]
      %v329 = vld [vmem:[%s4] sm:$0x1]
      %v331 = vlaneseq
      %v332 = vshrl.u32 %v331, 7
      %v333 = vsub.s32 0, %v332
      %v334 = vrot.slane %v329, %v333
      %vm336 = vcmask 31744
      %v338 = vsel %vm336, %v324, 0
      %v341 = vsel %vm336, %v325, 0
      %v344 = vsel %vm336, %v326, 0
      %v347 = vsel %vm336, %v327, 0
      %vm349 = vcmask 1041408
      %v351 = vsel %vm349, %v328, 0
      %353 = vmatprep.subr.bf16.mxu0 0
      %354 = vmatpush1.bf16.msra.mxu0 0
      %355 = vmatprep.subr.bf16.mxu0 0
      %356 = vmatpush1.bf16.msra.mxu0 0
      %357 = vmatprep.subr.bf16.mxu0 0
      %358 = vmatpush1.bf16.msra.mxu0 0
      %359 = vmatprep.subr.bf16.mxu0 0
      %360 = vmatpush1.bf16.msra.mxu0 0
      %361 = vmatprep.subr.bf16.mxu0 0
      %362 = vmatpush1.bf16.msra.mxu0 0
      %363 = vmatprep.subr.bf16.mxu0 0
      %364 = vmatpush1.bf16.msra.mxu0 0
      %365 = vmatprep.subr.bf16.mxu0 0
      %366 = vmatpush1.bf16.msra.mxu0 0
      %367 = vmatprep.subr.bf16.mxu0 0
      %368 = vmatpush1.bf16.msra.mxu0 %v351
      %369 = vmatprep.subr.bf16.mxu0 0
      %370 = vmatpush2.bf16.msra.mxu0 0
      %371 = vmatprep.subr.bf16.mxu0 0
      %372 = vmatpush2.bf16.msra.mxu0 0
      %373 = vmatprep.subr.bf16.mxu0 0
      %374 = vmatpush2.bf16.msra.mxu0 0
      %375 = vmatprep.subr.bf16.mxu0 0
      %376 = vmatpush2.bf16.msra.mxu0 0
      %377 = vmatprep.subr.bf16.mxu0 0
      %378 = vmatpush2.bf16.msra.mxu0 0
      %379 = vmatprep.subr.bf16.mxu0 0
      %380 = vmatpush2.bf16.msra.mxu0 0
      %381 = vmatprep.subr.bf16.mxu0 0
      %382 = vmatpush2.bf16.msra.mxu0 0
      %383 = vmatprep.subr.bf16.mxu0 0
      %384 = vmatpush2.bf16.msra.mxu0 0
      %385 = vmatprep.mubr.bf16.mxu0 0
      %386 = vmatmul.mubr.bf16.gmra.mxu0 %v338
      %v387 = vpop.f32.mrf.mxu0
      %v388 = vadd.f32 %v334, %v387
      %v389 = vpop.f32.mrf.mxu0
      %v390 = vpop.f32.mrf.mxu0
      %v391 = vadd.f32 %v334, %v390
      %v392 = vpop.f32.mrf.mxu0
      %393 = vmatprep.mubr.bf16.mxu0 0
      %394 = vmatmul.mubr.bf16.gmra.mxu0 %v341
      %v395 = vpop.f32.mrf.mxu0
      %v396 = vadd.f32 %v334, %v395
      %v397 = vpop.f32.mrf.mxu0
      %v398 = vpop.f32.mrf.mxu0
      %v399 = vadd.f32 %v334, %v398
      %v400 = vpop.f32.mrf.mxu0
      %401 = vmatprep.mubr.bf16.mxu0 0
      %402 = vmatmul.mubr.bf16.gmra.mxu0 %v344
      %v403 = vpop.f32.mrf.mxu0
      %v404 = vadd.f32 %v334, %v403
      %v405 = vpop.f32.mrf.mxu0
      %v406 = vpop.f32.mrf.mxu0
      %v407 = vadd.f32 %v334, %v406
      %v408 = vpop.f32.mrf.mxu0
      %409 = vmatprep.mubr.bf16.mxu0 0
      %410 = vmatmul.mubr.bf16.gmra.mxu0 %v347
      %v411 = vpop.f32.mrf.mxu0
      %v412 = vadd.f32 %v334, %v411
      %v413 = vpop.f32.mrf.mxu0
      %v414 = vpop.f32.mrf.mxu0
      %v415 = vadd.f32 %v334, %v414
      %v416 = vpop.f32.mrf.mxu0
      %417 = vdwg.mxu0
      %v418 = vld [vmem:[%s2] sm:$0x3]
      %v419 = vld [vmem:[%s5] sm:$0x1]
      %v421 = vlaneseq
      %v422 = vshrl.u32 %v421, 7
      %v423 = vsub.s32 0, %v422
      %v424 = vrot.slane %v419, %v423
      %v427 = vsel %vm349, %v418, 0
      %429 = vmatprep.subr.bf16.mxu0 0
      %430 = vmatpush1.bf16.msra.mxu0 0
      %431 = vmatprep.subr.bf16.mxu0 0
      %432 = vmatpush1.bf16.msra.mxu0 0
      %433 = vmatprep.subr.bf16.mxu0 0
      %434 = vmatpush1.bf16.msra.mxu0 0
      %435 = vmatprep.subr.bf16.mxu0 0
      %436 = vmatpush1.bf16.msra.mxu0 0
      %437 = vmatprep.subr.bf16.mxu0 0
      %438 = vmatpush1.bf16.msra.mxu0 0
      %439 = vmatprep.subr.bf16.mxu0 0
      %440 = vmatpush1.bf16.msra.mxu0 0
      %441 = vmatprep.subr.bf16.mxu0 0
      %442 = vmatpush1.bf16.msra.mxu0 0
      %443 = vmatprep.subr.bf16.mxu0 0
      %444 = vmatpush1.bf16.msra.mxu0 %v427
      %445 = vmatprep.subr.bf16.mxu0 0
      %446 = vmatpush2.bf16.msra.mxu0 0
      %447 = vmatprep.subr.bf16.mxu0 0
      %448 = vmatpush2.bf16.msra.mxu0 0
      %449 = vmatprep.subr.bf16.mxu0 0
      %450 = vmatpush2.bf16.msra.mxu0 0
      %451 = vmatprep.subr.bf16.mxu0 0
      %452 = vmatpush2.bf16.msra.mxu0 0
      %453 = vmatprep.subr.bf16.mxu0 0
      %454 = vmatpush2.bf16.msra.mxu0 0
      %455 = vmatprep.subr.bf16.mxu0 0
      %456 = vmatpush2.bf16.msra.mxu0 0
      %457 = vmatprep.subr.bf16.mxu0 0
      %458 = vmatpush2.bf16.msra.mxu0 0
      %459 = vmatprep.subr.bf16.mxu0 0
      %460 = vmatpush2.bf16.msra.mxu0 0
      %461 = vmatprep.mubr.bf16.mxu0 0
      %462 = vmatmul.mubr.bf16.gmra.mxu0 %v338
      %v463 = vpop.f32.mrf.mxu0
      %v464 = vadd.f32 %v424, %v463
      %v465 = vpop.f32.mrf.mxu0
      %v466 = vpop.f32.mrf.mxu0
      %v467 = vadd.f32 %v424, %v466
      %v468 = vpop.f32.mrf.mxu0
      %469 = vmatprep.mubr.bf16.mxu0 0
      %470 = vmatmul.mubr.bf16.gmra.mxu0 %v341
      %v471 = vpop.f32.mrf.mxu0
      %v472 = vadd.f32 %v424, %v471
      %v473 = vpop.f32.mrf.mxu0
      %v474 = vpop.f32.mrf.mxu0
      %v475 = vadd.f32 %v424, %v474
      %v476 = vpop.f32.mrf.mxu0
      %477 = vmatprep.mubr.bf16.mxu0 0
      %478 = vmatmul.mubr.bf16.gmra.mxu0 %v344
      %v479 = vpop.f32.mrf.mxu0
      %v480 = vadd.f32 %v424, %v479
      %v481 = vpop.f32.mrf.mxu0
      %v482 = vpop.f32.mrf.mxu0
      %v483 = vadd.f32 %v424, %v482
      %v484 = vpop.f32.mrf.mxu0
      %485 = vmatprep.mubr.bf16.mxu0 0
      %486 = vmatmul.mubr.bf16.gmra.mxu0 %v347
      %v487 = vpop.f32.mrf.mxu0
      %v488 = vadd.f32 %v424, %v487
      %v489 = vpop.f32.mrf.mxu0
      %v490 = vpop.f32.mrf.mxu0
      %v491 = vadd.f32 %v424, %v490
      %v492 = vpop.f32.mrf.mxu0
      %493 = vdwg.mxu0
      %v494 = vld [vmem:[%s3] sm:$0x3]
      %v495 = vld [vmem:[%s6] sm:$0x1]
      %v497 = vlaneseq
      %v498 = vshrl.u32 %v497, 7
      %v499 = vsub.s32 0, %v498
      %v500 = vrot.slane %v495, %v499
      %v503 = vsel %vm349, %v494, 0
      %505 = vmatprep.subr.bf16.mxu0 0
      %506 = vmatpush1.bf16.msra.mxu0 0
      %507 = vmatprep.subr.bf16.mxu0 0
      %508 = vmatpush1.bf16.msra.mxu0 0
      %509 = vmatprep.subr.bf16.mxu0 0
      %510 = vmatpush1.bf16.msra.mxu0 0
      %511 = vmatprep.subr.bf16.mxu0 0
      %512 = vmatpush1.bf16.msra.mxu0 0
      %513 = vmatprep.subr.bf16.mxu0 0
      %514 = vmatpush1.bf16.msra.mxu0 0
      %515 = vmatprep.subr.bf16.mxu0 0
      %516 = vmatpush1.bf16.msra.mxu0 0
      %517 = vmatprep.subr.bf16.mxu0 0
      %518 = vmatpush1.bf16.msra.mxu0 0
      %519 = vmatprep.subr.bf16.mxu0 0
      %520 = vmatpush1.bf16.msra.mxu0 %v503
      %521 = vmatprep.subr.bf16.mxu0 0
      %522 = vmatpush2.bf16.msra.mxu0 0
      %523 = vmatprep.subr.bf16.mxu0 0
      %524 = vmatpush2.bf16.msra.mxu0 0
      %525 = vmatprep.subr.bf16.mxu0 0
      %526 = vmatpush2.bf16.msra.mxu0 0
      %527 = vmatprep.subr.bf16.mxu0 0
      %528 = vmatpush2.bf16.msra.mxu0 0
      %529 = vmatprep.subr.bf16.mxu0 0
      %530 = vmatpush2.bf16.msra.mxu0 0
      %531 = vmatprep.subr.bf16.mxu0 0
      %532 = vmatpush2.bf16.msra.mxu0 0
      %533 = vmatprep.subr.bf16.mxu0 0
      %534 = vmatpush2.bf16.msra.mxu0 0
      %535 = vmatprep.subr.bf16.mxu0 0
      %536 = vmatpush2.bf16.msra.mxu0 0
      %537 = vmatprep.mubr.bf16.mxu0 0
      %538 = vmatmul.mubr.bf16.gmra.mxu0 %v338
      %v539 = vpop.f32.mrf.mxu0
      %v540 = vadd.f32 %v500, %v539
      %v541 = vpop.f32.mrf.mxu0
      %v542 = vpop.f32.mrf.mxu0
      %v543 = vadd.f32 %v500, %v542
      %v544 = vpop.f32.mrf.mxu0
      %545 = vmatprep.mubr.bf16.mxu0 0
      %546 = vmatmul.mubr.bf16.gmra.mxu0 %v341
      %v547 = vpop.f32.mrf.mxu0
      %v548 = vadd.f32 %v500, %v547
      %v549 = vpop.f32.mrf.mxu0
      %v550 = vpop.f32.mrf.mxu0
      %v551 = vadd.f32 %v500, %v550
      %v552 = vpop.f32.mrf.mxu0
      %553 = vmatprep.mubr.bf16.mxu0 0
      %554 = vmatmul.mubr.bf16.gmra.mxu0 %v344
      %v555 = vpop.f32.mrf.mxu0
      %v556 = vadd.f32 %v500, %v555
      %v557 = vpop.f32.mrf.mxu0
      %v558 = vpop.f32.mrf.mxu0
      %v559 = vadd.f32 %v500, %v558
      %v560 = vpop.f32.mrf.mxu0
      %561 = vmatprep.mubr.bf16.mxu0 0
      %562 = vmatmul.mubr.bf16.gmra.mxu0 %v347
      %v563 = vpop.f32.mrf.mxu0
      %v564 = vadd.f32 %v500, %v563
      %v565 = vpop.f32.mrf.mxu0
      %v566 = vpop.f32.mrf.mxu0
      %v567 = vadd.f32 %v500, %v566
      %v568 = vpop.f32.mrf.mxu0
      %569 = vdwg.mxu0
      %v570 = vpack.c.bf16 %v391, %v388
      %v571 = vpack.c.bf16 %v399, %v396
      %v572 = vpack.c.bf16 %v407, %v404
      %v573 = vpack.c.bf16 %v415, %v412
      %v574 = vpack.c.bf16 %v467, %v464
      %v575 = vpack.c.bf16 %v475, %v472
      %v576 = vpack.c.bf16 %v483, %v480
      %v577 = vpack.c.bf16 %v491, %v488
      %vm578 = vcmask 64512
      %v580 = vsel %vm578, %v570, 0
      %v583 = vsel %vm578, %v574, 0
      %585 = vmatprep.subr.bf16.mxu0 0
      %586 = vmatpush1.bf16.xpose.msra.mxu0 0
      %587 = vmatprep.subr.bf16.mxu0 0
      %588 = vmatpush1.bf16.xpose.msra.mxu0 0
      %589 = vmatprep.subr.bf16.mxu0 0
      %590 = vmatpush1.bf16.xpose.msra.mxu0 0
      %591 = vmatprep.subr.bf16.mxu0 0
      %592 = vmatpush1.bf16.xpose.msra.mxu0 0
      %593 = vmatprep.subr.bf16.mxu0 0
      %594 = vmatpush1.bf16.xpose.msra.mxu0 0
      %595 = vmatprep.subr.bf16.mxu0 0
      %596 = vmatpush1.bf16.xpose.msra.mxu0 0
      %597 = vmatprep.subr.bf16.mxu0 0
      %598 = vmatpush1.bf16.xpose.msra.mxu0 0
      %599 = vmatprep.subr.bf16.mxu0 0
      %600 = vmatpush1.bf16.xpose.msra.mxu0 %v583
      %601 = vmatprep.subr.bf16.mxu0 0
      %602 = vmatpush2.bf16.xpose.msra.mxu0 0
      %603 = vmatprep.subr.bf16.mxu0 0
      %604 = vmatpush2.bf16.xpose.msra.mxu0 0
      %605 = vmatprep.subr.bf16.mxu0 0
      %606 = vmatpush2.bf16.xpose.msra.mxu0 0
      %607 = vmatprep.subr.bf16.mxu0 0
      %608 = vmatpush2.bf16.xpose.msra.mxu0 0
      %609 = vmatprep.subr.bf16.mxu0 0
      %610 = vmatpush2.bf16.xpose.msra.mxu0 0
      %611 = vmatprep.subr.bf16.mxu0 0
      %612 = vmatpush2.bf16.xpose.msra.mxu0 0
      %613 = vmatprep.subr.bf16.mxu0 0
      %614 = vmatpush2.bf16.xpose.msra.mxu0 0
      %615 = vmatprep.subr.bf16.mxu0 0
      %616 = vmatpush2.bf16.xpose.msra.mxu0 0
      %617 = vmatprep.mubr.bf16.mxu0 0
      %618 = vmatmul.mubr.bf16.gmra.mxu0 %v580
      %v619 = vpop.f32.mrf.mxu0
      %v620 = vadd.f32 0.0, %v619
      %v621 = vpop.f32.mrf.mxu0
      %v622 = vpop.f32.mrf.mxu0
      %v623 = vadd.f32 0.0, %v622
      %v624 = vpop.f32.mrf.mxu0
      %625 = vdwg.mxu0
      %v627 = vsel %vm578, %v571, 0
      %v630 = vsel %vm578, %v575, 0
      %632 = vmatprep.subr.bf16.mxu0 0
      %633 = vmatpush1.bf16.xpose.msra.mxu0 0
      %634 = vmatprep.subr.bf16.mxu0 0
      %635 = vmatpush1.bf16.xpose.msra.mxu0 0
      %636 = vmatprep.subr.bf16.mxu0 0
      %637 = vmatpush1.bf16.xpose.msra.mxu0 0
      %638 = vmatprep.subr.bf16.mxu0 0
      %639 = vmatpush1.bf16.xpose.msra.mxu0 0
      %640 = vmatprep.subr.bf16.mxu0 0
      %641 = vmatpush1.bf16.xpose.msra.mxu0 0
      %642 = vmatprep.subr.bf16.mxu0 0
      %643 = vmatpush1.bf16.xpose.msra.mxu0 0
      %644 = vmatprep.subr.bf16.mxu0 0
      %645 = vmatpush1.bf16.xpose.msra.mxu0 0
      %646 = vmatprep.subr.bf16.mxu0 0
      %647 = vmatpush1.bf16.xpose.msra.mxu0 %v630
      %648 = vmatprep.subr.bf16.mxu0 0
      %649 = vmatpush2.bf16.xpose.msra.mxu0 0
      %650 = vmatprep.subr.bf16.mxu0 0
      %651 = vmatpush2.bf16.xpose.msra.mxu0 0
      %652 = vmatprep.subr.bf16.mxu0 0
      %653 = vmatpush2.bf16.xpose.msra.mxu0 0
      %654 = vmatprep.subr.bf16.mxu0 0
      %655 = vmatpush2.bf16.xpose.msra.mxu0 0
      %656 = vmatprep.subr.bf16.mxu0 0
      %657 = vmatpush2.bf16.xpose.msra.mxu0 0
      %658 = vmatprep.subr.bf16.mxu0 0
      %659 = vmatpush2.bf16.xpose.msra.mxu0 0
      %660 = vmatprep.subr.bf16.mxu0 0
      %661 = vmatpush2.bf16.xpose.msra.mxu0 0
      %662 = vmatprep.subr.bf16.mxu0 0
      %663 = vmatpush2.bf16.xpose.msra.mxu0 0
      %664 = vmatprep.mubr.bf16.mxu0 0
      %665 = vmatmul.mubr.bf16.gmra.mxu0 %v627
      %v666 = vpop.f32.mrf.mxu0
      %v667 = vadd.f32 0.0, %v666
      %v668 = vpop.f32.mrf.mxu0
      %v669 = vpop.f32.mrf.mxu0
      %v670 = vadd.f32 0.0, %v669
      %v671 = vpop.f32.mrf.mxu0
      %672 = vdwg.mxu0
      %v674 = vsel %vm578, %v572, 0
      %v677 = vsel %vm578, %v576, 0
      %679 = vmatprep.subr.bf16.mxu0 0
      %680 = vmatpush1.bf16.xpose.msra.mxu0 0
      %681 = vmatprep.subr.bf16.mxu0 0
      %682 = vmatpush1.bf16.xpose.msra.mxu0 0
      %683 = vmatprep.subr.bf16.mxu0 0
      %684 = vmatpush1.bf16.xpose.msra.mxu0 0
      %685 = vmatprep.subr.bf16.mxu0 0
      %686 = vmatpush1.bf16.xpose.msra.mxu0 0
      %687 = vmatprep.subr.bf16.mxu0 0
      %688 = vmatpush1.bf16.xpose.msra.mxu0 0
      %689 = vmatprep.subr.bf16.mxu0 0
      %690 = vmatpush1.bf16.xpose.msra.mxu0 0
      %691 = vmatprep.subr.bf16.mxu0 0
      %692 = vmatpush1.bf16.xpose.msra.mxu0 0
      %693 = vmatprep.subr.bf16.mxu0 0
      %694 = vmatpush1.bf16.xpose.msra.mxu0 %v677
      %695 = vmatprep.subr.bf16.mxu0 0
      %696 = vmatpush2.bf16.xpose.msra.mxu0 0
      %697 = vmatprep.subr.bf16.mxu0 0
      %698 = vmatpush2.bf16.xpose.msra.mxu0 0
      %699 = vmatprep.subr.bf16.mxu0 0
      %700 = vmatpush2.bf16.xpose.msra.mxu0 0
      %701 = vmatprep.subr.bf16.mxu0 0
      %702 = vmatpush2.bf16.xpose.msra.mxu0 0
      %703 = vmatprep.subr.bf16.mxu0 0
      %704 = vmatpush2.bf16.xpose.msra.mxu0 0
      %705 = vmatprep.subr.bf16.mxu0 0
      %706 = vmatpush2.bf16.xpose.msra.mxu0 0
      %707 = vmatprep.subr.bf16.mxu0 0
      %708 = vmatpush2.bf16.xpose.msra.mxu0 0
      %709 = vmatprep.subr.bf16.mxu0 0
      %710 = vmatpush2.bf16.xpose.msra.mxu0 0
      %711 = vmatprep.mubr.bf16.mxu0 0
      %712 = vmatmul.mubr.bf16.gmra.mxu0 %v674
      %v713 = vpop.f32.mrf.mxu0
      %v714 = vadd.f32 0.0, %v713
      %v715 = vpop.f32.mrf.mxu0
      %v716 = vpop.f32.mrf.mxu0
      %v717 = vadd.f32 0.0, %v716
      %v718 = vpop.f32.mrf.mxu0
      %719 = vdwg.mxu0
      %v721 = vsel %vm578, %v573, 0
      %v724 = vsel %vm578, %v577, 0
      %726 = vmatprep.subr.bf16.mxu0 0
      %727 = vmatpush1.bf16.xpose.msra.mxu0 0
      %728 = vmatprep.subr.bf16.mxu0 0
      %729 = vmatpush1.bf16.xpose.msra.mxu0 0
      %730 = vmatprep.subr.bf16.mxu0 0
      %731 = vmatpush1.bf16.xpose.msra.mxu0 0
      %732 = vmatprep.subr.bf16.mxu0 0
      %733 = vmatpush1.bf16.xpose.msra.mxu0 0
      %734 = vmatprep.subr.bf16.mxu0 0
      %735 = vmatpush1.bf16.xpose.msra.mxu0 0
      %736 = vmatprep.subr.bf16.mxu0 0
      %737 = vmatpush1.bf16.xpose.msra.mxu0 0
      %738 = vmatprep.subr.bf16.mxu0 0
      %739 = vmatpush1.bf16.xpose.msra.mxu0 0
      %740 = vmatprep.subr.bf16.mxu0 0
      %741 = vmatpush1.bf16.xpose.msra.mxu0 %v724
      %742 = vmatprep.subr.bf16.mxu0 0
      %743 = vmatpush2.bf16.xpose.msra.mxu0 0
      %744 = vmatprep.subr.bf16.mxu0 0
      %745 = vmatpush2.bf16.xpose.msra.mxu0 0
      %746 = vmatprep.subr.bf16.mxu0 0
      %747 = vmatpush2.bf16.xpose.msra.mxu0 0
      %748 = vmatprep.subr.bf16.mxu0 0
      %749 = vmatpush2.bf16.xpose.msra.mxu0 0
      %750 = vmatprep.subr.bf16.mxu0 0
      %751 = vmatpush2.bf16.xpose.msra.mxu0 0
      %752 = vmatprep.subr.bf16.mxu0 0
      %753 = vmatpush2.bf16.xpose.msra.mxu0 0
      %754 = vmatprep.subr.bf16.mxu0 0
      %755 = vmatpush2.bf16.xpose.msra.mxu0 0
      %756 = vmatprep.subr.bf16.mxu0 0
      %757 = vmatpush2.bf16.xpose.msra.mxu0 0
      %758 = vmatprep.mubr.bf16.mxu0 0
      %759 = vmatmul.mubr.bf16.gmra.mxu0 %v721
      %v760 = vpop.f32.mrf.mxu0
      %v761 = vadd.f32 0.0, %v760
      %v762 = vpop.f32.mrf.mxu0
      %v763 = vpop.f32.mrf.mxu0
      %v764 = vadd.f32 0.0, %v763
      %v765 = vpop.f32.mrf.mxu0
      %766 = vdwg.mxu0
      %vm767 = vcmask 130048
      %v768 = vsel %vm767, %v620, -inf
      %769 = vmax.xlane.f32.xlu0 %v768
      %v770 = vpop.xlane.xlu0 %769
      %v771 = vsel %vm767, %v623, -inf
      %772 = vmax.xlane.f32.xlu0 %v771
      %v773 = vpop.xlane.xlu0 %772
      %v774 = vsel %vm767, %v667, -inf
      %775 = vmax.xlane.f32.xlu0 %v774
      %v776 = vpop.xlane.xlu0 %775
      %v777 = vsel %vm767, %v670, -inf
      %778 = vmax.xlane.f32.xlu0 %v777
      %v779 = vpop.xlane.xlu0 %778
      %v780 = vsel %vm767, %v714, -inf
      %781 = vmax.xlane.f32.xlu0 %v780
      %v782 = vpop.xlane.xlu0 %781
      %v783 = vsel %vm767, %v717, -inf
      %784 = vmax.xlane.f32.xlu0 %v783
      %v785 = vpop.xlane.xlu0 %784
      %v786 = vsel %vm767, %v761, -inf
      %787 = vmax.xlane.f32.xlu0 %v786
      %v788 = vpop.xlane.xlu0 %787
      %v789 = vsel %vm767, %v764, -inf
      %790 = vmax.xlane.f32.xlu0 %v789
      %v791 = vpop.xlane.xlu0 %790
      %v792 = vsub.f32 %v620, %v770
      %v793 = vsub.f32 %v623, %v773
      %v794 = vsub.f32 %v667, %v776
      %v795 = vsub.f32 %v670, %v779
      %v796 = vsub.f32 %v714, %v782
      %v797 = vsub.f32 %v717, %v785
      %v798 = vsub.f32 %v761, %v788
      %v799 = vsub.f32 %v764, %v791
      %v800 = vmul.f32 %v792, 1.442695
      %v801 = vpow.pop %v800
      %v802 = vmul.f32 %v793, 1.442695
      %v803 = vpow.pop %v802
      %v804 = vmul.f32 %v794, 1.442695
      %v805 = vpow.pop %v804
      %v806 = vmul.f32 %v795, 1.442695
      %v807 = vpow.pop %v806
      %v808 = vmul.f32 %v796, 1.442695
      %v809 = vpow.pop %v808
      %v810 = vmul.f32 %v797, 1.442695
      %v811 = vpow.pop %v810
      %v812 = vmul.f32 %v798, 1.442695
      %v813 = vpow.pop %v812
      %v814 = vmul.f32 %v799, 1.442695
      %v815 = vpow.pop %v814
      %v816 = vsel %vm767, %v801, 0.0
      %817 = vadd.xlane.f32.xlu0 %v816
      %v818 = vpop.xlane.xlu0 %817
      %v819 = vsel %vm767, %v803, 0.0
      %820 = vadd.xlane.f32.xlu0 %v819
      %v821 = vpop.xlane.xlu0 %820
      %v822 = vsel %vm767, %v805, 0.0
      %823 = vadd.xlane.f32.xlu0 %v822
      %v824 = vpop.xlane.xlu0 %823
      %v825 = vsel %vm767, %v807, 0.0
      %826 = vadd.xlane.f32.xlu0 %v825
      %v827 = vpop.xlane.xlu0 %826
      %v828 = vsel %vm767, %v809, 0.0
      %829 = vadd.xlane.f32.xlu0 %v828
      %v830 = vpop.xlane.xlu0 %829
      %v831 = vsel %vm767, %v811, 0.0
      %832 = vadd.xlane.f32.xlu0 %v831
      %v833 = vpop.xlane.xlu0 %832
      %v834 = vsel %vm767, %v813, 0.0
      %835 = vadd.xlane.f32.xlu0 %v834
      %v836 = vpop.xlane.xlu0 %835
      %v837 = vsel %vm767, %v815, 0.0
      %838 = vadd.xlane.f32.xlu0 %v837
      %v839 = vpop.xlane.xlu0 %838
      %v840 = vrcp.pop %v818
      %v841 = vmul.f32 %v801, %v840
      %v842 = vrcp.pop %v821
      %v843 = vmul.f32 %v803, %v842
      %v844 = vrcp.pop %v824
      %v845 = vmul.f32 %v805, %v844
      %v846 = vrcp.pop %v827
      %v847 = vmul.f32 %v807, %v846
      %v848 = vrcp.pop %v830
      %v849 = vmul.f32 %v809, %v848
      %v850 = vrcp.pop %v833
      %v851 = vmul.f32 %v811, %v850
      %v852 = vrcp.pop %v836
      %v853 = vmul.f32 %v813, %v852
      %v854 = vrcp.pop %v839
      %v855 = vmul.f32 %v815, %v854
      %v856 = vpack.c.bf16 %v843, %v841
      %v857 = vpack.c.bf16 %v847, %v845
      %v858 = vpack.c.bf16 %v851, %v849
      %v859 = vpack.c.bf16 %v855, %v853
      %v860 = vpack.c.bf16 %v543, %v540
      %v861 = vpack.c.bf16 %v551, %v548
      %v862 = vpack.c.bf16 %v559, %v556
      %v863 = vpack.c.bf16 %v567, %v564
      %v865 = vsel %vm767, %v856, 0
      %867 = vmatprep.subr.bf16.mxu0 0
      %868 = vmatpush1.bf16.msra.mxu0 0
      %869 = vmatprep.subr.bf16.mxu0 0
      %870 = vmatpush1.bf16.msra.mxu0 0
      %871 = vmatprep.subr.bf16.mxu0 0
      %872 = vmatpush1.bf16.msra.mxu0 0
      %873 = vmatprep.subr.bf16.mxu0 0
      %874 = vmatpush1.bf16.msra.mxu0 0
      %875 = vmatprep.subr.bf16.mxu0 0
      %876 = vmatpush1.bf16.msra.mxu0 0
      %877 = vmatprep.subr.bf16.mxu0 0
      %878 = vmatpush1.bf16.msra.mxu0 0
      %879 = vmatprep.subr.bf16.mxu0 0
      %880 = vmatpush1.bf16.msra.mxu0 0
      %881 = vmatprep.subr.bf16.mxu0 0
      %882 = vmatpush1.bf16.msra.mxu0 %v860
      %883 = vmatprep.subr.bf16.mxu0 0
      %884 = vmatpush2.bf16.msra.mxu0 0
      %885 = vmatprep.subr.bf16.mxu0 0
      %886 = vmatpush2.bf16.msra.mxu0 0
      %887 = vmatprep.subr.bf16.mxu0 0
      %888 = vmatpush2.bf16.msra.mxu0 0
      %889 = vmatprep.subr.bf16.mxu0 0
      %890 = vmatpush2.bf16.msra.mxu0 0
      %891 = vmatprep.subr.bf16.mxu0 0
      %892 = vmatpush2.bf16.msra.mxu0 0
      %893 = vmatprep.subr.bf16.mxu0 0
      %894 = vmatpush2.bf16.msra.mxu0 0
      %895 = vmatprep.subr.bf16.mxu0 0
      %896 = vmatpush2.bf16.msra.mxu0 0
      %897 = vmatprep.subr.bf16.mxu0 0
      %898 = vmatpush2.bf16.msra.mxu0 0
      %899 = vmatprep.mubr.bf16.mxu0 0
      %900 = vmatmul.mubr.bf16.gmra.mxu0 %v865
      %v901 = vpop.f32.mrf.mxu0
      %v902 = vadd.f32 0.0, %v901
      %v903 = vpop.f32.mrf.mxu0
      %v904 = vpop.f32.mrf.mxu0
      %v905 = vadd.f32 0.0, %v904
      %v906 = vpop.f32.mrf.mxu0
      %907 = vdwg.mxu0
      %v909 = vsel %vm767, %v857, 0
      %911 = vmatprep.subr.bf16.mxu0 0
      %912 = vmatpush1.bf16.msra.mxu0 0
      %913 = vmatprep.subr.bf16.mxu0 0
      %914 = vmatpush1.bf16.msra.mxu0 0
      %915 = vmatprep.subr.bf16.mxu0 0
      %916 = vmatpush1.bf16.msra.mxu0 0
      %917 = vmatprep.subr.bf16.mxu0 0
      %918 = vmatpush1.bf16.msra.mxu0 0
      %919 = vmatprep.subr.bf16.mxu0 0
      %920 = vmatpush1.bf16.msra.mxu0 0
      %921 = vmatprep.subr.bf16.mxu0 0
      %922 = vmatpush1.bf16.msra.mxu0 0
      %923 = vmatprep.subr.bf16.mxu0 0
      %924 = vmatpush1.bf16.msra.mxu0 0
      %925 = vmatprep.subr.bf16.mxu0 0
      %926 = vmatpush1.bf16.msra.mxu0 %v861
      %927 = vmatprep.subr.bf16.mxu0 0
      %928 = vmatpush2.bf16.msra.mxu0 0
      %929 = vmatprep.subr.bf16.mxu0 0
      %930 = vmatpush2.bf16.msra.mxu0 0
      %931 = vmatprep.subr.bf16.mxu0 0
      %932 = vmatpush2.bf16.msra.mxu0 0
      %933 = vmatprep.subr.bf16.mxu0 0
      %934 = vmatpush2.bf16.msra.mxu0 0
      %935 = vmatprep.subr.bf16.mxu0 0
      %936 = vmatpush2.bf16.msra.mxu0 0
      %937 = vmatprep.subr.bf16.mxu0 0
      %938 = vmatpush2.bf16.msra.mxu0 0
      %939 = vmatprep.subr.bf16.mxu0 0
      %940 = vmatpush2.bf16.msra.mxu0 0
      %941 = vmatprep.subr.bf16.mxu0 0
      %942 = vmatpush2.bf16.msra.mxu0 0
      %943 = vmatprep.mubr.bf16.mxu0 0
      %944 = vmatmul.mubr.bf16.gmra.mxu0 %v909
      %v945 = vpop.f32.mrf.mxu0
      %v946 = vadd.f32 0.0, %v945
      %v947 = vpop.f32.mrf.mxu0
      %v948 = vpop.f32.mrf.mxu0
      %v949 = vadd.f32 0.0, %v948
      %v950 = vpop.f32.mrf.mxu0
      %951 = vdwg.mxu0
      %v953 = vsel %vm767, %v858, 0
      %955 = vmatprep.subr.bf16.mxu0 0
      %956 = vmatpush1.bf16.msra.mxu0 0
      %957 = vmatprep.subr.bf16.mxu0 0
      %958 = vmatpush1.bf16.msra.mxu0 0
      %959 = vmatprep.subr.bf16.mxu0 0
      %960 = vmatpush1.bf16.msra.mxu0 0
      %961 = vmatprep.subr.bf16.mxu0 0
      %962 = vmatpush1.bf16.msra.mxu0 0
      %963 = vmatprep.subr.bf16.mxu0 0
      %964 = vmatpush1.bf16.msra.mxu0 0
      %965 = vmatprep.subr.bf16.mxu0 0
      %966 = vmatpush1.bf16.msra.mxu0 0
      %967 = vmatprep.subr.bf16.mxu0 0
      %968 = vmatpush1.bf16.msra.mxu0 0
      %969 = vmatprep.subr.bf16.mxu0 0
      %970 = vmatpush1.bf16.msra.mxu0 %v862
      %971 = vmatprep.subr.bf16.mxu0 0
      %972 = vmatpush2.bf16.msra.mxu0 0
      %973 = vmatprep.subr.bf16.mxu0 0
      %974 = vmatpush2.bf16.msra.mxu0 0
      %975 = vmatprep.subr.bf16.mxu0 0
      %976 = vmatpush2.bf16.msra.mxu0 0
      %977 = vmatprep.subr.bf16.mxu0 0
      %978 = vmatpush2.bf16.msra.mxu0 0
      %979 = vmatprep.subr.bf16.mxu0 0
      %980 = vmatpush2.bf16.msra.mxu0 0
      %981 = vmatprep.subr.bf16.mxu0 0
      %982 = vmatpush2.bf16.msra.mxu0 0
      %983 = vmatprep.subr.bf16.mxu0 0
      %984 = vmatpush2.bf16.msra.mxu0 0
      %985 = vmatprep.subr.bf16.mxu0 0
      %986 = vmatpush2.bf16.msra.mxu0 0
      %987 = vmatprep.mubr.bf16.mxu0 0
      %988 = vmatmul.mubr.bf16.gmra.mxu0 %v953
      %v989 = vpop.f32.mrf.mxu0
      %v990 = vadd.f32 0.0, %v989
      %v991 = vpop.f32.mrf.mxu0
      %v992 = vpop.f32.mrf.mxu0
      %v993 = vadd.f32 0.0, %v992
      %v994 = vpop.f32.mrf.mxu0
      %995 = vdwg.mxu0
      %v997 = vsel %vm767, %v859, 0
      %999 = vmatprep.subr.bf16.mxu0 0
      %1000 = vmatpush1.bf16.msra.mxu0 0
      %1001 = vmatprep.subr.bf16.mxu0 0
      %1002 = vmatpush1.bf16.msra.mxu0 0
      %1003 = vmatprep.subr.bf16.mxu0 0
      %1004 = vmatpush1.bf16.msra.mxu0 0
      %1005 = vmatprep.subr.bf16.mxu0 0
      %1006 = vmatpush1.bf16.msra.mxu0 0
      %1007 = vmatprep.subr.bf16.mxu0 0
      %1008 = vmatpush1.bf16.msra.mxu0 0
      %1009 = vmatprep.subr.bf16.mxu0 0
      %1010 = vmatpush1.bf16.msra.mxu0 0
      %1011 = vmatprep.subr.bf16.mxu0 0
      %1012 = vmatpush1.bf16.msra.mxu0 0
      %1013 = vmatprep.subr.bf16.mxu0 0
      %1014 = vmatpush1.bf16.msra.mxu0 %v863
      %1015 = vmatprep.subr.bf16.mxu0 0
      %1016 = vmatpush2.bf16.msra.mxu0 0
      %1017 = vmatprep.subr.bf16.mxu0 0
      %1018 = vmatpush2.bf16.msra.mxu0 0
      %1019 = vmatprep.subr.bf16.mxu0 0
      %1020 = vmatpush2.bf16.msra.mxu0 0
      %1021 = vmatprep.subr.bf16.mxu0 0
      %1022 = vmatpush2.bf16.msra.mxu0 0
      %1023 = vmatprep.subr.bf16.mxu0 0
      %1024 = vmatpush2.bf16.msra.mxu0 0
      %1025 = vmatprep.subr.bf16.mxu0 0
      %1026 = vmatpush2.bf16.msra.mxu0 0
      %1027 = vmatprep.subr.bf16.mxu0 0
      %1028 = vmatpush2.bf16.msra.mxu0 0
      %1029 = vmatprep.subr.bf16.mxu0 0
      %1030 = vmatpush2.bf16.msra.mxu0 0
      %1031 = vmatprep.mubr.bf16.mxu0 0
      %1032 = vmatmul.mubr.bf16.gmra.mxu0 %v997
      %v1033 = vpop.f32.mrf.mxu0
      %v1034 = vadd.f32 0.0, %v1033
      %v1035 = vpop.f32.mrf.mxu0
      %v1036 = vpop.f32.mrf.mxu0
      %v1037 = vadd.f32 0.0, %v1036
      %v1038 = vpop.f32.mrf.mxu0
      %1039 = vdwg.mxu0
      %s1040 = sld [smem:[#allocation2]]
      %v1041 = vstv %s1040
      %v1042 = vmul.f32 %v1041, %v902
      %v1043 = vmul.f32 %v1041, %v905
      %v1044 = vmul.f32 %v1041, %v946
      %v1045 = vmul.f32 %v1041, %v949
      %v1046 = vmul.f32 %v1041, %v990
      %v1047 = vmul.f32 %v1041, %v993
      %v1048 = vmul.f32 %v1041, %v1034
      %v1049 = vmul.f32 %v1041, %v1037
      %v1050 = vadd.f32 %v1042, %v316
      %v1051 = vadd.f32 %v1043, %v317
      %v1052 = vadd.f32 %v1044, %v318
      %v1053 = vadd.f32 %v1045, %v319
      %v1054 = vadd.f32 %v1046, %v320
      %v1055 = vadd.f32 %v1047, %v321
      %v1056 = vadd.f32 %v1048, %v322
      %v1057 = vadd.f32 %v1049, %v323
      %1058 = vst.msk [vmem:[%s313] sm:$0xff] %vm336, %v1050
      %1059 = vst.msk [vmem:[%s313 + $0x8] sm:$0xff] %vm336, %v1051
      %1060 = vst.msk [vmem:[%s313 + $0x10] sm:$0xff] %vm336, %v1052
      %1061 = vst.msk [vmem:[%s313 + $0x18] sm:$0xff] %vm336, %v1053
      %1062 = vst.msk [vmem:[%s313 + $0x20] sm:$0xff] %vm336, %v1054
      %1063 = vst.msk [vmem:[%s313 + $0x28] sm:$0xff] %vm336, %v1055
      %1064 = vst.msk [vmem:[%s313 + $0x30] sm:$0xff] %vm336, %v1056
      %1065 = vst.msk [vmem:[%s313 + $0x38] sm:$0xff] %vm336, %v1057
      %s1066 = smul.u32 4, %s20
      %p1067 = scmp.lt.s32.totalorder %s1066, 31
      %s1068 = scalar_select %p1067, %s1066, 31
      %s1069 = smul.addr %s1068, 2
      %s1070 = smul.addr %s1069, 8
      %s1071 = scalar_lea.vmem %s8, %s1070
      // Predicated region
      $region53: #{tpu_custom_call.1} parent=51 // pred_check
        %p1072 = pneg %p211
      $region54: #{tpu_custom_call.1} parent=51 // pred_check_branch
        %1074 = sbr.rel (%p1072) target = $region56
      $region55: #{tpu_custom_call.1} parent=51 // pred_region
        %s1075 = smul.u32 4, %s20
      $region56: #{tpu_custom_call.1} parent=51 // pred_fallthru
        _
    $region52: #{tpu_custom_call.1} parent=5 // pred_fallthru
      _
    %p1076 = scmp.le.s32.totalorder 2, %s15
    // Predicated region
    $region57: #{tpu_custom_call.1} parent=5 // pred_check
      %p1077 = pneg %p1076
    $region58: #{tpu_custom_call.1} parent=5 // pred_check_branch
      %1079 = sbr.rel (%p1077) target = $region60
    $region59: #{tpu_custom_call.1} parent=5 // pred_region
      %s1080 = ssub.s32 %s15, 2
      // Predicated region
      $region61: #{tpu_custom_call.1} parent=59 // pred_check
        %p1081 = pneg %p217
      $region62: #{tpu_custom_call.1} parent=59 // pred_check_branch
        %1083 = sbr.rel (%p1081) target = $region64
      $region63: #{tpu_custom_call.1} parent=59 // pred_region
        %s1084 = smul.u32 4, %s21
        %p1085 = scmp.lt.s32.totalorder %s1084, 31
        %s1086 = scalar_select %p1085, %s1084, 31
        %s1087 = smul.addr %s1086, 2
        %s1088 = smul.addr %s1087, 8
        %s1089 = scalar_lea.vmem %s8, %s1088
      $region64: #{tpu_custom_call.1} parent=59 // pred_fallthru
        _
    $region60: #{tpu_custom_call.1} parent=5 // pred_fallthru
      _
  $region6: #{tpu_custom_call.1} parent=0 // loop_footer
    %s19 = sadd.s32 1, %s15
  $region7: #{tpu_custom_call.1} parent=0 // loop_footer_branch
    %14 = sbr.rel target = $region3
  $region8: #{tpu_custom_call.1} parent=0 // loop_exit
    _

</llo_original>
